<compile_context>
chip_gen: v5e
topology: v5e:2x2
jax: 0.10.0
libtpu: 0.0.40
codegen_flags: <defaults>
</compile_context>

<pallas_src>
import functools
import math

import jax
import jax.numpy as jnp
from jax import lax
from jax.experimental import pallas as pl
from jax.experimental.pallas import tpu as pltpu


def _pick_tile(dim: int, desired: int, align: int) -> int:
    """Largest tile <= desired that divides `dim` and is a multiple of `align`,
    falling back to the full dim (always a legal block size)."""
    if dim <= desired:
        return dim
    t = (desired // align) * align
    while t >= align:
        if dim % t == 0:
            return t
        t -= align
    return dim


# --------------------------- fused/stacked projection ---------------------------

def _stacked_matmul_kernel(x_ref, w_ref, o_ref, acc_ref):
    # x_ref: (tm, tk), w_ref: (1, tn, tk), o_ref: (1, tm, tn), acc_ref: (tm, tn) f32
    @pl.when(pl.program_id(3) == 0)
    def _():
        acc_ref[...] = jnp.zeros(acc_ref.shape, acc_ref.dtype)

    x = x_ref[...].astype(jnp.bfloat16)
    w = w_ref[0].astype(jnp.bfloat16)
    # y = x @ w.T without an in-kernel transpose: contract last dims directly.
    acc_ref[...] += lax.dot_general(
        x, w,
        dimension_numbers=(((1,), (1,)), ((), ())),
        preferred_element_type=jnp.float32)

    @pl.when(pl.program_id(3) == pl.num_programs(3) - 1)
    def _():
        o_ref[0] = acc_ref[...].astype(o_ref.dtype)


def stacked_linear(x, w, *, out_dtype=None):
    """y[p] = x @ w[p].T  for  x: (M, K), w: (P, N, K)  ->  (P, M, N)."""
    M, K = x.shape
    P, N, Kw = w.shape
    assert K == Kw
    out_dtype = out_dtype if out_dtype is not None else x.dtype

    tm = _pick_tile(M, 256, 8)
    tn = _pick_tile(N, 256, 128)
    tk = _pick_tile(K, 512, 128)

    return pl.pallas_call(
        _stacked_matmul_kernel,
        out_shape=jax.ShapeDtypeStruct((P, M, N), out_dtype),
        grid_spec=pltpu.PrefetchScalarGridSpec(
            num_scalar_prefetch=0,
            grid=(P, M // tm, N // tn, K // tk),
            in_specs=[
                pl.BlockSpec((tm, tk), lambda p, i, j, k: (i, k)),
                pl.BlockSpec((1, tn, tk), lambda p, i, j, k: (p, j, k)),
            ],
            out_specs=pl.BlockSpec((1, tm, tn), lambda p, i, j, k: (p, i, j)),
            scratch_shapes=[pltpu.VMEM((tm, tn), jnp.float32)],
        ),
        compiler_params=pltpu.CompilerParams(
            dimension_semantics=("parallel", "parallel", "parallel", "arbitrary"),
            vmem_limit_bytes=48 * 1024 * 1024,
        ),
    )(x, w)


# ------------------------------ flash attention ---------------------------------

def _flash_attn_kernel(q_ref, k_ref, v_ref, o_ref, m_sc, l_sc, acc_sc, *,
                       num_heads, d_k, tq, tkv):
    # q_ref: (1,1,tq,D), k_ref/v_ref: (1,1,tkv,D), o_ref: (1,tq,D)
    # m_sc/l_sc: (tq, H) f32 running max/sum, acc_sc: (tq, D) f32 accumulator.
    qi = pl.program_id(1)
    ki = pl.program_id(2)
    nk = pl.num_programs(2)

    @pl.when(ki == 0)
    def _():
        m_sc[...] = jnp.full(m_sc.shape, -jnp.inf, dtype=m_sc.dtype)
        l_sc[...] = jnp.zeros(l_sc.shape, l_sc.dtype)
        acc_sc[...] = jnp.zeros(acc_sc.shape, acc_sc.dtype)

    q_start = qi * tq
    kv_start = ki * tkv

    def process(apply_mask):
        q = q_ref[0, 0].astype(jnp.bfloat16)      # (tq, D); q pre-scaled by 1/sqrt(d_k)
        k = k_ref[0, 0].astype(jnp.bfloat16)      # (tkv, D)
        v = v_ref[0, 0].astype(jnp.bfloat16)      # (tkv, D)
        if apply_mask:
            row = q_start + lax.broadcasted_iota(jnp.int32, (tq, tkv), 0)
            col = kv_start + lax.broadcasted_iota(jnp.int32, (tq, tkv), 1)
            keep = col <= row

        m_all = m_sc[...]                         # (tq, H)
        l_all = l_sc[...]                         # (tq, H)
        acc = acc_sc[...]                         # (tq, D)

        new_m, new_l, new_acc = [], [], []
        for h in range(num_heads):
            sl = slice(h * d_k, (h + 1) * d_k)
            s = lax.dot_general(
                q[:, sl], k[:, sl],
                dimension_numbers=(((1,), (1,)), ((), ())),
                preferred_element_type=jnp.float32)          # (tq, tkv)
            if apply_mask:
                s = jnp.where(keep, s, jnp.float32(-1.0e9))
            m_prev = m_all[:, h:h + 1]                        # (tq, 1)
            m_new = jnp.maximum(m_prev, jnp.max(s, axis=-1, keepdims=True))
            alpha = jnp.exp(m_prev - m_new)
            p = jnp.exp(s - m_new)
            new_m.append(m_new)
            new_l.append(alpha * l_all[:, h:h + 1] +
                         jnp.sum(p, axis=-1, keepdims=True))
            pv = jnp.dot(p.astype(jnp.bfloat16), v[:, sl],
                         preferred_element_type=jnp.float32)  # (tq, d_k)
            new_acc.append(alpha * acc[:, sl] + pv)

        m_sc[...] = jnp.concatenate(new_m, axis=-1)
        l_sc[...] = jnp.concatenate(new_l, axis=-1)
        acc_sc[...] = jnp.concatenate(new_acc, axis=-1)

    # KV tile strictly below the causal diagonal: no masking needed.
    @pl.when(kv_start + tkv - 1 <= q_start)
    def _():
        process(apply_mask=False)

    # Diagonal (partially masked) KV tile. Fully-masked tiles are skipped.
    @pl.when((kv_start + tkv - 1 > q_start) & (kv_start <= q_start + tq - 1))
    def _():
        process(apply_mask=True)

    @pl.when(ki == nk - 1)
    def _():
        acc = acc_sc[...]
        inv = pl.reciprocal(l_sc[...], approx=True)           # (tq, H)
        cols = [acc[:, h * d_k:(h + 1) * d_k] * inv[:, h:h + 1]
                for h in range(num_heads)]
        o_ref[0] = jnp.concatenate(cols, axis=-1).astype(o_ref.dtype)


def causal_flash_attention(qkv, num_heads):
    """qkv: (3, B, S, D) packed Q/K/V (Q pre-scaled) -> (B, S, D) bf16."""
    _, B, S, D = qkv.shape
    assert D % num_heads == 0
    d_k = D // num_heads
    tq = _pick_tile(S, 256, 8)
    tkv = _pick_tile(S, 256, 8)

    kernel = functools.partial(_flash_attn_kernel, num_heads=num_heads,
                               d_k=d_k, tq=tq, tkv=tkv)
    q_spec = pl.BlockSpec((1, 1, tq, D), lambda b, qi, ki: (0, b, qi, 0))
    k_spec = pl.BlockSpec((1, 1, tkv, D), lambda b, qi, ki: (1, b, ki, 0))
    v_spec = pl.BlockSpec((1, 1, tkv, D), lambda b, qi, ki: (2, b, ki, 0))
    o_spec = pl.BlockSpec((1, tq, D), lambda b, qi, ki: (b, qi, 0))

    return pl.pallas_call(
        kernel,
        out_shape=jax.ShapeDtypeStruct((B, S, D), jnp.bfloat16),
        grid_spec=pltpu.PrefetchScalarGridSpec(
            num_scalar_prefetch=0,
            grid=(B, S // tq, S // tkv),
            in_specs=[q_spec, k_spec, v_spec],
            out_specs=o_spec,
            scratch_shapes=[
                pltpu.VMEM((tq, num_heads), jnp.float32),   # running max
                pltpu.VMEM((tq, num_heads), jnp.float32),   # running sum
                pltpu.VMEM((tq, D), jnp.float32),           # output accumulator
            ],
        ),
        compiler_params=pltpu.CompilerParams(
            dimension_semantics=("parallel", "parallel", "arbitrary"),
            vmem_limit_bytes=48 * 1024 * 1024,
        ),
    )(qkv, qkv, qkv)


# ------------------------------- full module fwd ---------------------------------

def multihead_self_attention(x, wq, wk, wv, wo, num_heads):
    """Forward pass matching MultiheadSelfAttention (rope=None, causal mask)."""
    B, S, D = x.shape
    assert D % num_heads == 0
    d_k = D // num_heads
    scale = 1.0 / math.sqrt(d_k)

    # Fused QKV weight; fold the 1/sqrt(d_k) softmax scale into wq (zero runtime cost).
    w_qkv = jnp.stack([wq * scale, wk, wv], axis=0)           # (3, D, D)

    qkv = stacked_linear(x.reshape(B * S, D), w_qkv,
                         out_dtype=jnp.bfloat16)              # (3, B*S, D)
    qkv = qkv.reshape(3, B, S, D)

    attn = causal_flash_attention(qkv, num_heads)             # (B, S, D) bf16

    out = stacked_linear(attn.reshape(B * S, D), wo[None, ...],
                         out_dtype=jnp.float32)               # (1, B*S, D)
    return out[0].reshape(B, S, D)


# ------------------------------ reference (pure JAX) ------------------------------

def reference_forward(x, wq, wk, wv, wo, num_heads):
    B, S, D = x.shape
    d_k = D // num_heads
    q = jnp.einsum('bsd,od->bso', x, wq)
    k = jnp.einsum('bsd,od->bso', x, wk)
    v = jnp.einsum('bsd,od->bso', x, wv)

    def split(t):
        return jnp.transpose(t.reshape(B, S, num_heads, d_k), (0, 2, 1, 3))

    q, k, v = split(q), split(k), split(v)
    scores = jnp.einsum('bhqd,bhkd->bhqk', q, k) / jnp.sqrt(jnp.float32(d_k))
    mask = jnp.tril(jnp.ones((S, S), dtype=bool))
    scores = jnp.where(mask[None, None], scores, jnp.float32(-1.0e9))
    weights = jax.nn.softmax(scores, axis=-1)
    out = jnp.einsum('bhqk,bhkd->bhqd', weights, v)
    out = jnp.transpose(out, (0, 2, 1, 3)).reshape(B, S, D)
    return jnp.einsum('bsd,od->bso', out, wo)


# -------------------------------------- main --------------------------------------

if __name__ == "__main__":
    B, S, D, H = 2, 8, 32, 4   # batch, seq, d_model, num_heads  (d_k = 8)

    key = jax.random.PRNGKey(0)
    kx, kq, kk, kv, ko = jax.random.split(key, 5)

    x = jax.random.normal(kx, (B, S, D), dtype=jnp.float32)
    # Linear weights: (out_features, in_features), no bias (matches cs336 Linear).
    wq = jax.random.normal(kq, (D, D), dtype=jnp.float32) * 0.1
    wk = jax.random.normal(kk, (D, D), dtype=jnp.float32) * 0.1
    wv = jax.random.normal(kv, (D, D), dtype=jnp.float32) * 0.1
    wo = jax.random.normal(ko, (D, D), dtype=jnp.float32) * 0.1

    out = multihead_self_attention(x, wq, wk, wv, wo, H)
    out = jax.block_until_ready(out)

    ref = reference_forward(x, wq, wk, wv, wo, H)
    assert out.shape == (B, S, D)
    # bf16 MXU inputs + approx reciprocal -> relaxed tolerance vs f32 reference.
    assert jnp.allclose(out, ref, atol=5e-2, rtol=5e-2), (
        "mismatch vs reference, max abs diff = %f"
        % float(jnp.max(jnp.abs(out - ref))))

    # TODO(synk): RoPE branch (theta/apply_rope) intentionally not implemented;
    # the module defaults to rope=None.
    print("KERNEL_OK")
</pallas_src>

<mosaic_0001>
module attributes {stable_mosaic.version = 11 : i64} {
  func.func @_stacked_matmul_kernel(%arg0: i32, %arg1: i32, %arg2: i32, %arg3: i32, %arg4: memref<16x32xf32, #tpu.memory_space<vmem>>, %arg5: memref<1x32x32xf32, #tpu.memory_space<vmem>>, %arg6: memref<1x16x32xbf16, #tpu.memory_space<vmem>>, %arg7: memref<16x32xf32, #tpu.memory_space<vmem>>) attributes {dimension_semantics = [#tpu.dimension_semantics<parallel>, #tpu.dimension_semantics<parallel>, #tpu.dimension_semantics<parallel>, #tpu.dimension_semantics<arbitrary>], iteration_bounds = array<i64: 3, 1, 1, 1>, scalar_prefetch = 0 : i64, scratch_operands = 1 : i64, tpu.core_type = #tpu.core_type<tc>, window_params = [{transform_indices = @transform_0, window_bounds = array<i64: 16, 32>}, {transform_indices = @transform_1, window_bounds = array<i64: 1, 32, 32>}, {transform_indices = @transform_2, window_bounds = array<i64: 1, 16, 32>}]} {
    %c0_i32 = arith.constant 0 : i32
    %0 = arith.cmpi eq, %arg3, %c0_i32 : i32
    %1 = arith.extui %0 : i1 to i32
    %c0_i32_0 = arith.constant 0 : i32
    %2 = arith.cmpi ne, %1, %c0_i32_0 : i32
    scf.if %2 {
      %cst_11 = arith.constant 0.000000e+00 : f32
      %15 = vector.broadcast %cst_11 : f32 to vector<16x32xf32>
      %c0_12 = arith.constant 0 : index
      %c0_13 = arith.constant 0 : index
      %16 = vector.load %arg7[%c0_12, %c0_13] : memref<16x32xf32, #tpu.memory_space<vmem>>, vector<16x32xf32>
      tpu.vector_store %arg7[%c0_12, %c0_13], %15 {strides = array<i32>} : memref<16x32xf32, #tpu.memory_space<vmem>>, vector<16x32xf32>,
    } else {
    }
    %c0 = arith.constant 0 : index
    %c0_1 = arith.constant 0 : index
    %3 = vector.load %arg4[%c0, %c0_1] : memref<16x32xf32, #tpu.memory_space<vmem>>, vector<16x32xf32>
    %4 = arith.truncf %3 : vector<16x32xf32> to vector<16x32xbf16>
    %c0_2 = arith.constant 0 : index
    %c0_3 = arith.constant 0 : index
    %c0_4 = arith.constant 0 : index
    %5 = vector.load %arg5[%c0_2, %c0_3, %c0_4] : memref<1x32x32xf32, #tpu.memory_space<vmem>>, vector<1x32x32xf32>
    %6 = vector.shape_cast %5 : vector<1x32x32xf32> to vector<32x32xf32>
    %7 = arith.truncf %6 : vector<32x32xf32> to vector<32x32xbf16>
    %c0_5 = arith.constant 0 : index
    %c0_6 = arith.constant 0 : index
    %8 = vector.load %arg7[%c0_5, %c0_6] : memref<16x32xf32, #tpu.memory_space<vmem>>, vector<16x32xf32>
    %cst = arith.constant dense<0.000000e+00> : vector<16x32xf32>
    %9 = tpu.matmul %4, %7, %cst {dimension_numbers = #tpu.dot_dimension_numbers<[1], [1], [0], [0], [0, 0, 1, 0], [], []>} : vector<16x32xbf16>, vector<32x32xbf16>, vector<16x32xf32> -> vector<16x32xf32>
    %10 = arith.addf %8, %9 : vector<16x32xf32>
    %c0_7 = arith.constant 0 : index
    %c0_8 = arith.constant 0 : index
    %11 = vector.load %arg7[%c0_7, %c0_8] : memref<16x32xf32, #tpu.memory_space<vmem>>, vector<16x32xf32>
    tpu.vector_store %arg7[%c0_7, %c0_8], %10 {strides = array<i32>} : memref<16x32xf32, #tpu.memory_space<vmem>>, vector<16x32xf32>,
    %c0_i32_9 = arith.constant 0 : i32
    %12 = arith.cmpi eq, %arg3, %c0_i32_9 : i32
    %13 = arith.extui %12 : i1 to i32
    %c0_i32_10 = arith.constant 0 : i32
    %14 = arith.cmpi ne, %13, %c0_i32_10 : i32
    scf.if %14 {
      %c0_11 = arith.constant 0 : index
      %c0_12 = arith.constant 0 : index
      %15 = vector.load %arg7[%c0_11, %c0_12] : memref<16x32xf32, #tpu.memory_space<vmem>>, vector<16x32xf32>
      %16 = arith.truncf %15 : vector<16x32xf32> to vector<16x32xbf16>
      %c0_13 = arith.constant 0 : index
      %c0_14 = arith.constant 0 : index
      %c0_15 = arith.constant 0 : index
      %17 = vector.load %arg6[%c0_13, %c0_14, %c0_15] : memref<1x16x32xbf16, #tpu.memory_space<vmem>>, vector<1x16x32xbf16>
      %18 = vector.shape_cast %17 : vector<1x16x32xbf16> to vector<16x32xbf16>
      %19 = vector.shape_cast %16 : vector<16x32xbf16> to vector<1x16x32xbf16>
      tpu.vector_store %arg6[%c0_13, %c0_14, %c0_15], %19 {strides = array<i32>} : memref<1x16x32xbf16, #tpu.memory_space<vmem>>, vector<1x16x32xbf16>,
    } else {
    }
    return
  }
  func.func @transform_0(%arg0: i32, %arg1: i32, %arg2: i32, %arg3: i32) -> (i32, i32) {
    %c0_i32 = arith.constant 0 : i32
    return %arg1, %arg3 : i32, i32
  }
  func.func @transform_1(%arg0: i32, %arg1: i32, %arg2: i32, %arg3: i32) -> (i32, i32, i32) {
    %c0_i32 = arith.constant 0 : i32
    return %arg0, %arg2, %arg3 : i32, i32, i32
  }
  func.func @transform_2(%arg0: i32, %arg1: i32, %arg2: i32, %arg3: i32) -> (i32, i32, i32) {
    %c0_i32 = arith.constant 0 : i32
    return %arg0, %arg1, %arg2 : i32, i32, i32
  }
}

</mosaic_0001>

<llo_original>
// kernel: tpu_custom_call.1
$region0: #{tpu_custom_call.1}
  #allocation0 [shape = 'u32[]', space=smem, size = 0x4, offset = 0x4, fixed_abs, tag = 'smem constant byte address 0x4 - core index']
  #allocation1 [shape = 'u32[72,128]{1,0:T(1,128)}', space=vmem, size = 0x9000, scoped, tag = 'internal scratch']
  #allocation2 [shape = 'f32[16,32]{1,0:T(8,128)}', space=vmem, size = 0x2000, scoped, tag = 'scratch operand']
  %s0 = inlined_call_operand.hbm [shape: f32[16,32], index: 0, kind: input, shape index: {}]
  %s1 = inlined_call_operand.hbm [shape: f32[3,32,32], index: 1, kind: input, shape index: {}]
  %s2 = inlined_call_operand.hbm [shape: bf16[3,16,32], index: 2, kind: output, shape index: {}]
  %s3 = sld [smem:[#allocation0]]
  $region57: #{tpu_custom_call.1} parent=0
    _
  %s5 = ssub.s32 1, %s3
  %s6 = scalar_select 0, %s5, %s3
  $region1: #{tpu_custom_call.1} parent=0
    #allocation3 [shape = 'u8[8192]{0}', space=vmem, size = 0x2000, scoped, tag = 'input window, operand 0, single buffered']
    #allocation4 [shape = 's32[2]{0}', space=sflag, size = 0x8, scoped, tag = 'scoped memory for tpu_custom_call.1']
    #allocation5 [shape = 's32[2]{0}', space=sflag, size = 0x8, scoped, tag = 'scoped memory for tpu_custom_call.1']
    #allocation6 [shape = 'u8[32768]{0}', space=vmem, size = 0x8000, scoped, tag = 'input window, operand 1']
    #allocation7 [shape = 's32[2]{0}', space=sflag, size = 0x8, scoped, tag = 'scoped memory for tpu_custom_call.1']
    #allocation8 [shape = 'u8[8192]{0}', space=vmem, size = 0x2000, scoped, tag = 'output window, operand 0']
    %7 = vsyncpa [#allocation4], 0
    %8 = vsyncpa [#allocation7], 0
    %s9 = scalar_lea.sflag [#allocation7], 1
    %10 = vsyncpa %s9, 0
    %11 = vsyncpa [#allocation5], 0
    %s12 = scalar_lea.sflag [#allocation5], 1
    %13 = vsyncpa %s12, 0
    loop: start=0, step=1, limit=5
    $region2: #{tpu_custom_call.1} parent=1 // loop_pre_header
      _
    $region3: #{tpu_custom_call.1} parent=1 // loop_header
      %s15 = sphi 0, %s19
      %p16 = scmp.ge.s32.totalorder %s15, 5
      %s22 = sphi 0, %s48
      %s23 = sphi 0, %s44
      %s24 = sphi 0, %s40
      %s25 = sphi 0, %s36
      %s26 = sphi 0, %s22
      %s27 = sphi 0, %s23
      %s28 = sphi 0, %s24
      %s29 = sphi 0, %s25
      %s30 = sphi 0, %s26
      %s31 = sphi 0, %s27
      %s32 = sphi 0, %s28
      %s33 = sphi 0, %s29
      %s53 = sphi 0, %s55
      %s56 = sphi 0, %s53
      %s57 = sphi 0, %s56
      %s73 = sphi 0, %s57
      %s83 = sphi 0, %s85
      %s86 = sphi 0, %s83
      %s87 = sphi 0, %s86
      %s103 = sphi 0, %s87
      %s113 = sphi 0, %s115
      %s116 = sphi 0, %s113
      %s117 = sphi 0, %s116
      %s133 = sphi 0, %s117
    $region4: #{tpu_custom_call.1} parent=1 // loop_header_branch
      %18 = sbr.rel (%p16) target = $region8
    $region5: #{tpu_custom_call.1} parent=1 // loop_body
      %s20 = ssub.s32 %s15, 1
      %s21 = ssub.s32 %s15, 2
      %s34 = sadd.s32 1, %s25
      %p35 = scmp.ge.s32.totalorder %s34, 1
      %s36 = scalar_select %p35, 0, %s34
      %s37 = sadd.s32 1, %s24
      %s38 = scalar_select %p35, %s37, %s24
      %p39 = scmp.ge.s32.totalorder %s38, 1
      %s40 = scalar_select %p39, 0, %s38
      %s41 = sadd.s32 1, %s23
      %s42 = scalar_select %p39, %s41, %s23
      %p43 = scmp.ge.s32.totalorder %s42, 1
      %s44 = scalar_select %p43, 0, %s42
      %s45 = sadd.s32 1, %s22
      %s46 = scalar_select %p43, %s45, %s22
      %p47 = scmp.ge.s32.totalorder %s46, 3
      %s48 = scalar_select %p47, 0, %s46
      %s49 = ssub.s32 %s23, %s44
      %s50 = ssub.s32 %s25, %s36
      %s51 = sor.u32 %s49, %s50
      %p52 = scmp.eq.s32.totalorder %s51, 0
      %s54 = sadd.s32 %s53, 1
      %s55 = scalar_select %p52, %s53, %s54
      %p58 = pneg %p52
      %p59 = scmp.eq.s32.totalorder %s15, 2
      %p60 = por %p58, %p59
      %p61 = scmp.ne.s32.totalorder %s53, %s56
      %p62 = scmp.eq.s32.totalorder %s15, 0
      %p63 = por %p61, %p62
      %p64 = scmp.ne.s32.totalorder %s53, %s56
      %p65 = scmp.eq.s32.totalorder %s20, 2
      %p66 = por %p64, %p65
      %p67 = scmp.ne.s32.totalorder %s56, %s57
      %p68 = scmp.eq.s32.totalorder %s20, 0
      %p69 = por %p67, %p68
      %p70 = scmp.ne.s32.totalorder %s56, %s57
      %p71 = scmp.eq.s32.totalorder %s21, 2
      %p72 = por %p70, %p71
      %p74 = scmp.ne.s32.totalorder %s57, %s73
      %p75 = scmp.eq.s32.totalorder %s21, 0
      %p76 = por %p74, %p75
      %s77 = ssub.s32 %s22, %s48
      %s78 = ssub.s32 %s24, %s40
      %s79 = sor.u32 %s77, %s78
      %s80 = ssub.s32 %s25, %s36
      %s81 = sor.u32 %s79, %s80
      %p82 = scmp.eq.s32.totalorder %s81, 0
      %s84 = sadd.s32 %s83, 1
      %s85 = scalar_select %p82, %s83, %s84
      %p88 = pneg %p82
      %p89 = scmp.eq.s32.totalorder %s15, 2
      %p90 = por %p88, %p89
      %p91 = scmp.ne.s32.totalorder %s83, %s86
      %p92 = scmp.eq.s32.totalorder %s15, 0
      %p93 = por %p91, %p92
      %p94 = scmp.ne.s32.totalorder %s83, %s86
      %p95 = scmp.eq.s32.totalorder %s20, 2
      %p96 = por %p94, %p95
      %p97 = scmp.ne.s32.totalorder %s86, %s87
      %p98 = scmp.eq.s32.totalorder %s20, 0
      %p99 = por %p97, %p98
      %p100 = scmp.ne.s32.totalorder %s86, %s87
      %p101 = scmp.eq.s32.totalorder %s21, 2
      %p102 = por %p100, %p101
      %p104 = scmp.ne.s32.totalorder %s87, %s103
      %p105 = scmp.eq.s32.totalorder %s21, 0
      %p106 = por %p104, %p105
      %s107 = ssub.s32 %s22, %s48
      %s108 = ssub.s32 %s23, %s44
      %s109 = sor.u32 %s107, %s108
      %s110 = ssub.s32 %s24, %s40
      %s111 = sor.u32 %s109, %s110
      %p112 = scmp.eq.s32.totalorder %s111, 0
      %s114 = sadd.s32 %s113, 1
      %s115 = scalar_select %p112, %s113, %s114
      %p118 = pneg %p112
      %p119 = scmp.eq.s32.totalorder %s15, 2
      %p120 = por %p118, %p119
      %p121 = scmp.ne.s32.totalorder %s113, %s116
      %p122 = scmp.eq.s32.totalorder %s15, 0
      %p123 = por %p121, %p122
      %p124 = scmp.ne.s32.totalorder %s113, %s116
      %p125 = scmp.eq.s32.totalorder %s20, 2
      %p126 = por %p124, %p125
      %p127 = scmp.ne.s32.totalorder %s116, %s117
      %p128 = scmp.eq.s32.totalorder %s20, 0
      %p129 = por %p127, %p128
      %p130 = scmp.ne.s32.totalorder %s116, %s117
      %p131 = scmp.eq.s32.totalorder %s21, 2
      %p132 = por %p130, %p131
      %p134 = scmp.ne.s32.totalorder %s117, %s133
      %p135 = scmp.eq.s32.totalorder %s21, 0
      %p136 = por %p134, %p135
      %p137 = scmp.le.s32.totalorder 1, %s15
      %p138 = scmp.lt.s32.totalorder %s15, 4
      %p139 = pnand %p137, %p138
      %p140 = pneg %p139
      // Predicated region
      $region9: #{tpu_custom_call.1} parent=5 // pred_check
        _
      $region10: #{tpu_custom_call.1} parent=5 // pred_check_branch
        %142 = sbr.rel (%p139) target = $region12
      $region11: #{tpu_custom_call.1} parent=5 // pred_region
        %s143 = ssub.s32 %s15, 1
        // Predicated region
        $region13: #{tpu_custom_call.1} parent=11 // pred_check
          %p144 = pneg %p69
        $region14: #{tpu_custom_call.1} parent=11 // pred_check_branch
          %146 = sbr.rel (%p144) target = $region16
        $region15: #{tpu_custom_call.1} parent=11 // pred_region
          %s147 = smul.u32 2, %s27
          %149 = vsyncadd [#allocation4], 0
          %s150 = sadd.s32 %s29, %s147
          %s151 = smul.addr %s150, 8
          %s152 = scalar_lea.hbm %s0, %s151
          %s153 = sshll.u32 %s152, 4
          %s154 = int_to_ptr.hbm [resolvable:$true] %s153
          %s155 = sshll.u32 [#allocation3], 4
          %s156 = int_to_ptr.vmem [resolvable:$true] %s155
          %161 = dma.hbm_to_vmem [thread:$0]  %s154, 256, %s156, [#allocation4], 128, 128, 8
        $region16: #{tpu_custom_call.1} parent=11 // pred_fallthru
          _
      $region12: #{tpu_custom_call.1} parent=5 // pred_fallthru
        _
      %p162 = scmp.lt.s32.totalorder %s15, 3
      // Predicated region
      $region17: #{tpu_custom_call.1} parent=5 // pred_check
        %p163 = pneg %p162
      $region18: #{tpu_custom_call.1} parent=5 // pred_check_branch
        %165 = sbr.rel (%p163) target = $region20
      $region19: #{tpu_custom_call.1} parent=5 // pred_region
        // Predicated region
        $region21: #{tpu_custom_call.1} parent=19 // pred_check
          %p166 = pneg %p93
        $region22: #{tpu_custom_call.1} parent=19 // pred_check_branch
          %168 = sbr.rel (%p166) target = $region24
        $region23: #{tpu_custom_call.1} parent=19 // pred_region
          %s169 = sand.u32 %s83, 1
          %s170 = scalar_lea.sflag [#allocation7], %s169
          %s171 = sand.u32 %s83, 1
          %s172 = smul.addr %s171, 32
          %s173 = scalar_lea.vmem [#allocation6], %s172
          %s174 = smul.u32 4, %s24
          %176 = vsyncadd %s170, 0
          %s177 = sadd.s32 %s25, %s174
          %s178 = smul.addr %s22, 4
          %s179 = sadd.s32 %s177, %s178
          %s180 = smul.addr %s179, 8
          %s181 = scalar_lea.hbm %s1, %s180
          %s182 = sshll.u32 %s181, 4
          %s183 = int_to_ptr.hbm [resolvable:$true] %s182
          %s184 = sshll.u32 %s173, 4
          %s185 = int_to_ptr.vmem [resolvable:$true] %s184
          %190 = dma.hbm_to_vmem [thread:$0]  %s183, 512, %s185, %s170, 128, 128, 8
        $region24: #{tpu_custom_call.1} parent=19 // pred_fallthru
          _
      $region20: #{tpu_custom_call.1} parent=5 // pred_fallthru
        _
      %p191 = scmp.le.s32.totalorder 1, %s15
      %p192 = scmp.lt.s32.totalorder %s15, 4
      %p193 = pnand %p191, %p192
      %p194 = pneg %p193
      // Predicated region
      $region25: #{tpu_custom_call.1} parent=5 // pred_check
        _
      $region26: #{tpu_custom_call.1} parent=5 // pred_check_branch
        %196 = sbr.rel (%p193) target = $region28
      $region27: #{tpu_custom_call.1} parent=5 // pred_region
        %s197 = ssub.s32 %s15, 1
        // Predicated region
        $region29: #{tpu_custom_call.1} parent=27 // pred_check
          %p198 = pneg %p69
        $region30: #{tpu_custom_call.1} parent=27 // pred_check_branch
          %200 = sbr.rel (%p198) target = $region32
        $region31: #{tpu_custom_call.1} parent=27 // pred_region
          %202 = dma.done [#allocation4], 256
        $region32: #{tpu_custom_call.1} parent=27 // pred_fallthru
          _
        %s203 = sand.u32 %s86, 1
        %s204 = scalar_lea.sflag [#allocation7], %s203
        %s205 = sand.u32 %s86, 1
        %s206 = smul.addr %s205, 32
        %s207 = scalar_lea.vmem [#allocation6], %s206
        // Predicated region
        $region33: #{tpu_custom_call.1} parent=27 // pred_check
          %p208 = pneg %p99
        $region34: #{tpu_custom_call.1} parent=27 // pred_check_branch
          %210 = sbr.rel (%p208) target = $region36
        $region35: #{tpu_custom_call.1} parent=27 // pred_region
          %212 = dma.done %s204, 512
        $region36: #{tpu_custom_call.1} parent=27 // pred_fallthru
          _
        %p213 = pneg %p69
        %p214 = pneg %p66
        %s215 = sand.u32 %s86, 1
        %s216 = scalar_lea.sflag [#allocation7], %s215
        %s217 = sand.u32 %s86, 1
        %s218 = smul.addr %s217, 32
        %s219 = scalar_lea.vmem [#allocation6], %s218
        %p220 = pneg %p99
        %p221 = pneg %p96
        %p222 = pneg %p129
        %p223 = pneg %p126
        %s224 = sand.u32 %s116, 1
        %s225 = scalar_lea.sflag [#allocation5], %s224
        %s226 = sand.u32 %s116, 1
        %s227 = smul.addr %s226, 8
        %s228 = scalar_lea.vmem [#allocation8], %s227
        %s229 = smul.u32 2, %s27
        %s230 = smul.u32 4, %s28
        %s231 = smul.u32 2, %s27
        %p233 = scmp.eq.s32.totalorder %s29, 0
        // Predicated region
        $region37: #{tpu_custom_call.1} parent=27 // pred_check
          %p234 = pneg %p233
        $region38: #{tpu_custom_call.1} parent=27 // pred_check_branch
          %236 = sbr.rel (%p234) target = $region40
        $region39: #{tpu_custom_call.1} parent=27 // pred_region
          %vm237 = vcmask 261120
          %238 = vst.msk [vmem:[#allocation2] sm:$0xff] %vm237, 0.0
          %239 = vst.msk [vmem:[#allocation2 + $0x8] sm:$0xff] %vm237, 0.0
        $region40: #{tpu_custom_call.1} parent=27 // pred_fallthru
          _
        %v240 = vld [vmem:[#allocation3] sm:$0xff]
        %v241 = vld [vmem:[#allocation3 + $0x8] sm:$0xff]
        %v242 = vpack.c.bf16 %v241, %v240
        %v243 = vld [vmem:[%s207] sm:$0xff]
        %v244 = vld [vmem:[%s207 + $0x8] sm:$0xff]
        %v245 = vld [vmem:[%s207 + $0x10] sm:$0xff]
        %v246 = vld [vmem:[%s207 + $0x18] sm:$0xff]
        %v247 = vpack.c.bf16 %v244, %v243
        %v248 = vpack.c.bf16 %v246, %v245
        %v249 = vld [vmem:[#allocation2] sm:$0xff]
        %v250 = vld [vmem:[#allocation2 + $0x8] sm:$0xff]
        %vm251 = vcmask 261120
        %v253 = vsel %vm251, %v242, 0
        %v256 = vsel %vm251, %v247, 0
        %v259 = vsel %vm251, %v248, 0
        %261 = vmatpush.bf16.xpose.msra.mxu0 0
        %262 = vmatpush.bf16.xpose.msra.mxu0 0
        %263 = vmatpush.bf16.xpose.msra.mxu0 0
        %264 = vmatpush.bf16.xpose.msra.mxu0 0
        %265 = vmatpush.bf16.xpose.msra.mxu0 0
        %266 = vmatpush.bf16.xpose.msra.mxu0 0
        %267 = vmatpush.bf16.xpose.msra.mxu0 %v259
        %268 = vmatpush.bf16.xpose.msra.mxu0 %v256
        %269 = vmatmul.bf16.gmra.mxu0 %v253
        %v270 = vpop.f32.mrf.mxu0
        %v271 = vadd.f32 0.0, %v270
        %v272 = vpop.f32.mrf.mxu0
        %v273 = vadd.f32 0.0, %v272
        %274 = vdwg.mxu0
        %v275 = vadd.f32 %v249, %v271
        %v276 = vadd.f32 %v250, %v273
        %277 = vst.msk [vmem:[#allocation2] sm:$0xff] %vm251, %v275
        %278 = vst.msk [vmem:[#allocation2 + $0x8] sm:$0xff] %vm251, %v276
        // Predicated region
        $region41: #{tpu_custom_call.1} parent=27 // pred_check
          %p279 = pneg %p233
        $region42: #{tpu_custom_call.1} parent=27 // pred_check_branch
          %281 = sbr.rel (%p279) target = $region44
        $region43: #{tpu_custom_call.1} parent=27 // pred_region
          %v282 = vld [vmem:[#allocation2] sm:$0xff]
          %v283 = vld [vmem:[#allocation2 + $0x8] sm:$0xff]
          %v284 = vpack.c.bf16 %v282, %v282
          %v285 = vpack.c.bf16 %v283, %v283
          %vm286 = vcmask 257024
          %287 = vst.msk [vmem:[%s228] sm:$0xf] %vm286, %v284
          %288 = vst.msk [vmem:[%s228 + $0x4] sm:$0xf] %vm286, %v285
        $region44: #{tpu_custom_call.1} parent=27 // pred_fallthru
          _
        %s289 = sand.u32 %s116, 1
        %s290 = scalar_lea.sflag [#allocation5], %s289
        %s291 = sand.u32 %s116, 1
        %s292 = smul.addr %s291, 8
        %s293 = scalar_lea.vmem [#allocation8], %s292
        // Predicated region
        $region45: #{tpu_custom_call.1} parent=27 // pred_check
          %p294 = pneg %p126
        $region46: #{tpu_custom_call.1} parent=27 // pred_check_branch
          %296 = sbr.rel (%p294) target = $region48
        $region47: #{tpu_custom_call.1} parent=27 // pred_region
          %s297 = smul.u32 2, %s27
          %299 = vsyncadd %s290, 0
          %s300 = sadd.s32 %s28, %s297
          %s301 = smul.addr %s26, 2
          %s302 = sadd.s32 %s300, %s301
          %s303 = smul.addr %s302, 4
          %s304 = scalar_lea.hbm %s2, %s303
          %s305 = sshll.u32 %s293, 4
          %s306 = int_to_ptr.vmem [resolvable:$true] %s305
          %s307 = sshll.u32 %s304, 4
          %s308 = int_to_ptr.hbm [resolvable:$true] %s307
          %313 = dma.vmem_to_hbm [thread:$0]  %s306, 128, %s308, %s290, 64, 64, 4
        $region48: #{tpu_custom_call.1} parent=27 // pred_fallthru
          _
      $region28: #{tpu_custom_call.1} parent=5 // pred_fallthru
        _
      %p314 = scmp.le.s32.totalorder 2, %s15
      // Predicated region
      $region49: #{tpu_custom_call.1} parent=5 // pred_check
        %p315 = pneg %p314
      $region50: #{tpu_custom_call.1} parent=5 // pred_check_branch
        %317 = sbr.rel (%p315) target = $region52
      $region51: #{tpu_custom_call.1} parent=5 // pred_region
        %s318 = ssub.s32 %s15, 2
        // Predicated region
        $region53: #{tpu_custom_call.1} parent=51 // pred_check
          %p319 = pneg %p132
        $region54: #{tpu_custom_call.1} parent=51 // pred_check_branch
          %321 = sbr.rel (%p319) target = $region56
        $region55: #{tpu_custom_call.1} parent=51 // pred_region
          %s322 = sand.u32 %s117, 1
          %s323 = scalar_lea.sflag [#allocation5], %s322
          %s324 = sand.u32 %s117, 1
          %s325 = smul.addr %s324, 8
          %s326 = scalar_lea.vmem [#allocation8], %s325
          %328 = dma.done %s323, 128
        $region56: #{tpu_custom_call.1} parent=51 // pred_fallthru
          _
      $region52: #{tpu_custom_call.1} parent=5 // pred_fallthru
        _
    $region6: #{tpu_custom_call.1} parent=1 // loop_footer
      %s19 = sadd.s32 1, %s15
    $region7: #{tpu_custom_call.1} parent=1 // loop_footer_branch
      %14 = sbr.rel target = $region3
    $region8: #{tpu_custom_call.1} parent=1 // loop_exit
      _
    %329 = vsyncpa [#allocation4], 1
    %s330 = scalar_lea.sflag [#allocation4], 1
    %331 = vsyncpa %s330, 1
    %332 = vsyncpa [#allocation7], 1
    %s333 = scalar_lea.sflag [#allocation7], 1
    %334 = vsyncpa %s333, 1
    %335 = vsyncpa [#allocation5], 1
    %s336 = scalar_lea.sflag [#allocation5], 1
    %337 = vsyncpa %s336, 1

</llo_original>
